<compile_context>
chip_gen: v7x
topology: tpu7x:2x2x1
jax: 0.10.0
libtpu: 0.0.40
codegen_flags: <defaults>
</compile_context>

<pallas_src>
import jax
import jax.numpy as jnp
from jax.experimental import pallas as pl
from jax.experimental.pallas import tpu as pltpu


def _round_up(x, m):
    return ((x + m - 1) // m) * m


def actor_critic_kernel(
    x_ref,
    w1_ref, b1_ref,
    w2_ref, b2_ref,
    wh1_ref, bh1_ref,   # fused head layer 1: [wa1 | wc1], [ba1 | bc1]
    wh2_ref, bh2_ref,   # fused head layer 2: block-diag [wa2 ; wc2], packed to out_w lanes
    out_ref,            # (tm, out_w) packed [logits | value | zero pad]
):
    # bf16 MXU operands, f32 accumulation; biases/activations stay f32 until the
    # next matmul's operand cast.
    x = x_ref[...].astype(jnp.bfloat16)

    # feature_extractor: Linear -> ReLU -> (Dropout=id) -> Linear -> ReLU -> (Dropout=id)
    h = jnp.dot(x, w1_ref[...], preferred_element_type=jnp.float32) + b1_ref[...]
    h = jnp.maximum(h, 0.0).astype(jnp.bfloat16)
    h = jnp.dot(h, w2_ref[...], preferred_element_type=jnp.float32) + b2_ref[...]
    h = jnp.maximum(h, 0.0).astype(jnp.bfloat16)

    # fused actor+critic hidden layer: [a | c] = ReLU(h @ [wa1|wc1] + [ba1|bc1])
    ac = jnp.dot(h, wh1_ref[...], preferred_element_type=jnp.float32) + bh1_ref[...]
    ac = jnp.maximum(ac, 0.0).astype(jnp.bfloat16)

    # fused final projections (block-diagonal weight): one narrow f32 store.
    out_ref[...] = (
        jnp.dot(ac, wh2_ref[...], preferred_element_type=jnp.float32) + bh2_ref[...]
    )


def _full_spec(shape):
    # Helper avoids late-binding-lambda bugs: `shape` is bound per call.
    # Constant index_map -> block never changes -> weights stay VMEM-resident.
    return pl.BlockSpec(shape, lambda i: (0,) * len(shape))


def prepare_fused_params(p):
    """One-time packing of PyTorch-equivalent params into kernel-ready fused tensors.

    Called once at init / param update; NOT per forward call.
    """
    hidden = p["w1"].shape[1]
    half_a = p["wa1"].shape[1]
    half_c = p["wc1"].shape[1]
    action_dim = p["wa2"].shape[1]
    out_w = _round_up(action_dim + 1, 8)        # logits | value | zero pad
    k2 = half_a + half_c

    wh1 = jnp.concatenate([p["wa1"], p["wc1"]], axis=1)          # (H, half_a+half_c)
    bh1 = jnp.concatenate([p["ba1"], p["bc1"]], axis=1)          # (1, half_a+half_c)

    wh2 = jnp.zeros((k2, out_w), jnp.float32)
    wh2 = wh2.at[:half_a, :action_dim].set(p["wa2"])                   # actor block
    wh2 = wh2.at[half_a:, action_dim:action_dim + 1].set(p["wc2"])     # critic block
    bh2 = jnp.zeros((1, out_w), jnp.float32)
    bh2 = bh2.at[:, :action_dim].set(p["ba2"])
    bh2 = bh2.at[:, action_dim:action_dim + 1].set(p["bc2"])

    return {
        "w1": p["w1"].astype(jnp.bfloat16), "b1": p["b1"],
        "w2": p["w2"].astype(jnp.bfloat16), "b2": p["b2"],
        "wh1": wh1.astype(jnp.bfloat16), "bh1": bh1,
        "wh2": wh2.astype(jnp.bfloat16), "bh2": bh2,
        "action_dim": action_dim,
        "hidden": hidden,
    }


def actor_critic_forward(state, fused, *, tm=1024):
    """state: (B, state_dim) float32 -> (logits (B, action_dim), value (B, 1))."""
    B, state_dim = state.shape
    action_dim = fused["action_dim"]
    hidden = fused["hidden"]
    kh = fused["wh1"].shape[1]
    out_w = fused["wh2"].shape[1]

    # --- batch tiling ---
    bp8 = _round_up(B, 8)                       # f32 sublane
    if bp8 >= 16:
        # Ensure >= 2 grid steps so the "parallel" axis can shard across
        # v7x's 2 TensorCores (harmless on single-TC v5e/v6e).
        tm = min(tm, _round_up(pl.cdiv(bp8, 2), 8))
    tm = max(8, min(tm, bp8))
    b_pad = pl.cdiv(bp8, tm) * tm
    state_p = jnp.pad(state, ((0, b_pad - B), (0, 0))) if b_pad != B else state
    grid = (b_pad // tm,)

    weight_args = (
        fused["w1"], fused["b1"], fused["w2"], fused["b2"],
        fused["wh1"], fused["bh1"], fused["wh2"], fused["bh2"],
    )
    weight_bytes = sum(int(w.size) * w.dtype.itemsize for w in weight_args)

    # Advisory cost estimate so XLA schedules this tiny custom call sensibly.
    flops = 2 * b_pad * (state_dim * hidden + hidden * hidden + hidden * kh + kh * out_w)
    bytes_accessed = b_pad * state_dim * 4 + b_pad * out_w * 4 + weight_bytes

    # Rough per-step VMEM footprint: double-buffered input/output tiles,
    # resident weights, f32 intermediates.
    est_vmem = (2 * tm * state_dim * 4 + 2 * tm * out_w * 4
                + 3 * tm * hidden * 4 + weight_bytes)
    cp_kwargs = dict(dimension_semantics=("parallel",))
    if est_vmem > 12 * 1024 * 1024:   # approaching v5e's 16 MiB scoped default
        cp_kwargs["vmem_limit_bytes"] = int(min(2 * est_vmem, 64 * 1024 * 1024))

    in_specs = [pl.BlockSpec((tm, state_dim), lambda i: (i, 0))] + [
        _full_spec(w.shape) for w in weight_args
    ]
    out_specs = pl.BlockSpec((tm, out_w), lambda i: (i, 0))

    out = pl.pallas_call(
        actor_critic_kernel,
        out_shape=jax.ShapeDtypeStruct((b_pad, out_w), jnp.float32),
        grid=grid,
        in_specs=in_specs,
        out_specs=out_specs,
        compiler_params=pltpu.CompilerParams(**cp_kwargs),
        cost_estimate=pl.CostEstimate(
            flops=flops, transcendentals=0, bytes_accessed=bytes_accessed),
    )(state_p, *weight_args)

    logits = out[:B, :action_dim]
    value = out[:B, action_dim:action_dim + 1]
    return logits, value


def xavier_uniform(key, fan_in, fan_out):
    limit = jnp.sqrt(6.0 / (fan_in + fan_out))
    return jax.random.uniform(
        key, (fan_in, fan_out), dtype=jnp.float32, minval=-limit, maxval=limit
    )


def init_params(key, state_dim=21, action_dim=7, hidden_dim=128):
    """Deterministic xavier-uniform weights / zero biases, matching _init_weights."""
    ks = jax.random.split(key, 6)
    half = hidden_dim // 2
    return {
        "w1": xavier_uniform(ks[0], state_dim, hidden_dim),
        "b1": jnp.zeros((1, hidden_dim), jnp.float32),
        "w2": xavier_uniform(ks[1], hidden_dim, hidden_dim),
        "b2": jnp.zeros((1, hidden_dim), jnp.float32),
        "wa1": xavier_uniform(ks[2], hidden_dim, half),
        "ba1": jnp.zeros((1, half), jnp.float32),
        "wa2": xavier_uniform(ks[3], half, action_dim),
        "ba2": jnp.zeros((1, action_dim), jnp.float32),
        "wc1": xavier_uniform(ks[4], hidden_dim, half),
        "bc1": jnp.zeros((1, half), jnp.float32),
        "wc2": xavier_uniform(ks[5], half, 1),
        "bc2": jnp.zeros((1, 1), jnp.float32),
    }


def reference_forward(state, p):
    h = jnp.maximum(state @ p["w1"] + p["b1"], 0.0)
    h = jnp.maximum(h @ p["w2"] + p["b2"], 0.0)
    a = jnp.maximum(h @ p["wa1"] + p["ba1"], 0.0)
    logits = a @ p["wa2"] + p["ba2"]
    c = jnp.maximum(h @ p["wc1"] + p["bc1"], 0.0)
    value = c @ p["wc2"] + p["bc2"]
    return logits, value


if __name__ == "__main__":
    key = jax.random.PRNGKey(0)
    k_state, k_params, k_big = jax.random.split(key, 3)

    B, STATE_DIM, ACTION_DIM, HIDDEN_DIM = 2, 21, 7, 128
    params = init_params(k_params, STATE_DIM, ACTION_DIM, HIDDEN_DIM)
    fused = prepare_fused_params(params)   # one-time packing, hoisted out of forward

    # Small inference batch (B=2, padded to 8 inside the wrapper).
    state = jax.random.normal(k_state, (B, STATE_DIM), dtype=jnp.float32)
    logits, value = actor_critic_forward(state, fused)
    logits = jax.block_until_ready(logits)
    value = jax.block_until_ready(value)

    ref_logits, ref_value = reference_forward(state, params)
    assert logits.shape == (B, ACTION_DIM) and value.shape == (B, 1)
    # bf16 MXU operands (f32 accumulation) -> ~1e-3-scale deviation from f32 ref.
    assert jnp.allclose(logits, ref_logits, atol=3e-2, rtol=3e-2)
    assert jnp.allclose(value, ref_value, atol=3e-2, rtol=3e-2)

    # Larger ragged batch exercises padding + the >=2-step parallel grid (v7x dual-TC).
    B2 = 300
    state2 = jax.random.normal(k_big, (B2, STATE_DIM), dtype=jnp.float32)
    logits2, value2 = actor_critic_forward(state2, fused)
    logits2 = jax.block_until_ready(logits2)
    value2 = jax.block_until_ready(value2)
    ref_logits2, ref_value2 = reference_forward(state2, params)
    assert logits2.shape == (B2, ACTION_DIM) and value2.shape == (B2, 1)
    assert jnp.allclose(logits2, ref_logits2, atol=3e-2, rtol=3e-2)
    assert jnp.allclose(value2, ref_value2, atol=3e-2, rtol=3e-2)

    print("KERNEL_OK")
</pallas_src>

<mosaic_0001>
module attributes {stable_mosaic.version = 11 : i64} {
  func.func @actor_critic_kernel(%arg0: i32, %arg1: memref<8x21xf32, #tpu.memory_space<vmem>>, %arg2: memref<21x128xbf16, #tpu.memory_space<vmem>>, %arg3: memref<1x128xf32, #tpu.memory_space<vmem>>, %arg4: memref<128x128xbf16, #tpu.memory_space<vmem>>, %arg5: memref<1x128xf32, #tpu.memory_space<vmem>>, %arg6: memref<128x128xbf16, #tpu.memory_space<vmem>>, %arg7: memref<1x128xf32, #tpu.memory_space<vmem>>, %arg8: memref<128x8xbf16, #tpu.memory_space<vmem>>, %arg9: memref<1x8xf32, #tpu.memory_space<vmem>>, %arg10: memref<8x8xf32, #tpu.memory_space<vmem>>) attributes {dimension_semantics = [#tpu.dimension_semantics<parallel>], iteration_bounds = array<i64: 1>, scalar_prefetch = 0 : i64, scratch_operands = 0 : i64, tpu.core_type = #tpu.core_type<tc>, window_params = [{transform_indices = @transform_0, window_bounds = array<i64: 8, 21>}, {pipeline_mode = #tpu.pipeline_mode<synchronous>, transform_indices = @transform_1, window_bounds = array<i64: 21, 128>}, {pipeline_mode = #tpu.pipeline_mode<synchronous>, transform_indices = @transform_2, window_bounds = array<i64: 1, 128>}, {pipeline_mode = #tpu.pipeline_mode<synchronous>, transform_indices = @transform_3, window_bounds = array<i64: 128, 128>}, {pipeline_mode = #tpu.pipeline_mode<synchronous>, transform_indices = @transform_4, window_bounds = array<i64: 1, 128>}, {pipeline_mode = #tpu.pipeline_mode<synchronous>, transform_indices = @transform_5, window_bounds = array<i64: 128, 128>}, {pipeline_mode = #tpu.pipeline_mode<synchronous>, transform_indices = @transform_6, window_bounds = array<i64: 1, 128>}, {pipeline_mode = #tpu.pipeline_mode<synchronous>, transform_indices = @transform_7, window_bounds = array<i64: 128, 8>}, {pipeline_mode = #tpu.pipeline_mode<synchronous>, transform_indices = @transform_8, window_bounds = array<i64: 1, 8>}, {transform_indices = @transform_9, window_bounds = array<i64: 8, 8>}]} {
    %c0 = arith.constant 0 : index
    %c0_0 = arith.constant 0 : index
    %0 = vector.load %arg1[%c0, %c0_0] : memref<8x21xf32, #tpu.memory_space<vmem>>, vector<8x21xf32>
    %1 = arith.truncf %0 : vector<8x21xf32> to vector<8x21xbf16>
    %c0_1 = arith.constant 0 : index
    %c0_2 = arith.constant 0 : index
    %2 = vector.load %arg2[%c0_1, %c0_2] : memref<21x128xbf16, #tpu.memory_space<vmem>>, vector<21x128xbf16>
    %cst = arith.constant dense<0.000000e+00> : vector<8x128xf32>
    %3 = tpu.matmul %1, %2, %cst {dimension_numbers = #tpu.dot_dimension_numbers<[1], [0], [0], [1], [0, 0, 1, 1], [], []>} : vector<8x21xbf16>, vector<21x128xbf16>, vector<8x128xf32> -> vector<8x128xf32>
    %c0_3 = arith.constant 0 : index
    %c0_4 = arith.constant 0 : index
    %4 = vector.load %arg3[%c0_3, %c0_4] : memref<1x128xf32, #tpu.memory_space<vmem>>, vector<1x128xf32>
    %5 = vector.broadcast %4 : vector<1x128xf32> to vector<8x128xf32>
    %6 = arith.addf %3, %5 : vector<8x128xf32>
    %cst_5 = arith.constant 0.000000e+00 : f32
    %7 = vector.broadcast %cst_5 : f32 to vector<8x128xf32>
    %8 = arith.maximumf %6, %7 : vector<8x128xf32>
    %9 = arith.truncf %8 : vector<8x128xf32> to vector<8x128xbf16>
    %c0_6 = arith.constant 0 : index
    %c0_7 = arith.constant 0 : index
    %10 = vector.load %arg4[%c0_6, %c0_7] : memref<128x128xbf16, #tpu.memory_space<vmem>>, vector<128x128xbf16>
    %cst_8 = arith.constant dense<0.000000e+00> : vector<8x128xf32>
    %11 = tpu.matmul %9, %10, %cst_8 {dimension_numbers = #tpu.dot_dimension_numbers<[1], [0], [0], [1], [0, 0, 1, 1], [], []>} : vector<8x128xbf16>, vector<128x128xbf16>, vector<8x128xf32> -> vector<8x128xf32>
    %c0_9 = arith.constant 0 : index
    %c0_10 = arith.constant 0 : index
    %12 = vector.load %arg5[%c0_9, %c0_10] : memref<1x128xf32, #tpu.memory_space<vmem>>, vector<1x128xf32>
    %13 = vector.broadcast %12 : vector<1x128xf32> to vector<8x128xf32>
    %14 = arith.addf %11, %13 : vector<8x128xf32>
    %cst_11 = arith.constant 0.000000e+00 : f32
    %15 = vector.broadcast %cst_11 : f32 to vector<8x128xf32>
    %16 = arith.maximumf %14, %15 : vector<8x128xf32>
    %17 = arith.truncf %16 : vector<8x128xf32> to vector<8x128xbf16>
    %c0_12 = arith.constant 0 : index
    %c0_13 = arith.constant 0 : index
    %18 = vector.load %arg6[%c0_12, %c0_13] : memref<128x128xbf16, #tpu.memory_space<vmem>>, vector<128x128xbf16>
    %cst_14 = arith.constant dense<0.000000e+00> : vector<8x128xf32>
    %19 = tpu.matmul %17, %18, %cst_14 {dimension_numbers = #tpu.dot_dimension_numbers<[1], [0], [0], [1], [0, 0, 1, 1], [], []>} : vector<8x128xbf16>, vector<128x128xbf16>, vector<8x128xf32> -> vector<8x128xf32>
    %c0_15 = arith.constant 0 : index
    %c0_16 = arith.constant 0 : index
    %20 = vector.load %arg7[%c0_15, %c0_16] : memref<1x128xf32, #tpu.memory_space<vmem>>, vector<1x128xf32>
    %21 = vector.broadcast %20 : vector<1x128xf32> to vector<8x128xf32>
    %22 = arith.addf %19, %21 : vector<8x128xf32>
    %cst_17 = arith.constant 0.000000e+00 : f32
    %23 = vector.broadcast %cst_17 : f32 to vector<8x128xf32>
    %24 = arith.maximumf %22, %23 : vector<8x128xf32>
    %25 = arith.truncf %24 : vector<8x128xf32> to vector<8x128xbf16>
    %c0_18 = arith.constant 0 : index
    %c0_19 = arith.constant 0 : index
    %26 = vector.load %arg8[%c0_18, %c0_19] : memref<128x8xbf16, #tpu.memory_space<vmem>>, vector<128x8xbf16>
    %cst_20 = arith.constant dense<0.000000e+00> : vector<8x8xf32>
    %27 = tpu.matmul %25, %26, %cst_20 {dimension_numbers = #tpu.dot_dimension_numbers<[1], [0], [0], [1], [0, 0, 1, 1], [], []>} : vector<8x128xbf16>, vector<128x8xbf16>, vector<8x8xf32> -> vector<8x8xf32>
    %c0_21 = arith.constant 0 : index
    %c0_22 = arith.constant 0 : index
    %28 = vector.load %arg9[%c0_21, %c0_22] : memref<1x8xf32, #tpu.memory_space<vmem>>, vector<1x8xf32>
    %29 = vector.broadcast %28 : vector<1x8xf32> to vector<8x8xf32>
    %30 = arith.addf %27, %29 : vector<8x8xf32>
    %c0_23 = arith.constant 0 : index
    %c0_24 = arith.constant 0 : index
    %31 = vector.load %arg10[%c0_23, %c0_24] : memref<8x8xf32, #tpu.memory_space<vmem>>, vector<8x8xf32>
    tpu.vector_store %arg10[%c0_23, %c0_24], %30 {strides = array<i32>} : memref<8x8xf32, #tpu.memory_space<vmem>>, vector<8x8xf32>,
    return
  }
  func.func @transform_0(%arg0: i32) -> (i32, i32) {
    %c0_i32 = arith.constant 0 : i32
    %c0_i32_0 = arith.constant 0 : i32
    return %arg0, %c0_i32 : i32, i32
  }
  func.func @transform_1(%arg0: i32) -> (i32, i32) {
    %c0_i32 = arith.constant 0 : i32
    %c0_i32_0 = arith.constant 0 : i32
    %c0_i32_1 = arith.constant 0 : i32
    return %c0_i32, %c0_i32_0 : i32, i32
  }
  func.func @transform_2(%arg0: i32) -> (i32, i32) {
    %c0_i32 = arith.constant 0 : i32
    %c0_i32_0 = arith.constant 0 : i32
    %c0_i32_1 = arith.constant 0 : i32
    return %c0_i32, %c0_i32_0 : i32, i32
  }
  func.func @transform_3(%arg0: i32) -> (i32, i32) {
    %c0_i32 = arith.constant 0 : i32
    %c0_i32_0 = arith.constant 0 : i32
    %c0_i32_1 = arith.constant 0 : i32
    return %c0_i32, %c0_i32_0 : i32, i32
  }
  func.func @transform_4(%arg0: i32) -> (i32, i32) {
    %c0_i32 = arith.constant 0 : i32
    %c0_i32_0 = arith.constant 0 : i32
    %c0_i32_1 = arith.constant 0 : i32
    return %c0_i32, %c0_i32_0 : i32, i32
  }
  func.func @transform_5(%arg0: i32) -> (i32, i32) {
    %c0_i32 = arith.constant 0 : i32
    %c0_i32_0 = arith.constant 0 : i32
    %c0_i32_1 = arith.constant 0 : i32
    return %c0_i32, %c0_i32_0 : i32, i32
  }
  func.func @transform_6(%arg0: i32) -> (i32, i32) {
    %c0_i32 = arith.constant 0 : i32
    %c0_i32_0 = arith.constant 0 : i32
    %c0_i32_1 = arith.constant 0 : i32
    return %c0_i32, %c0_i32_0 : i32, i32
  }
  func.func @transform_7(%arg0: i32) -> (i32, i32) {
    %c0_i32 = arith.constant 0 : i32
    %c0_i32_0 = arith.constant 0 : i32
    %c0_i32_1 = arith.constant 0 : i32
    return %c0_i32, %c0_i32_0 : i32, i32
  }
  func.func @transform_8(%arg0: i32) -> (i32, i32) {
    %c0_i32 = arith.constant 0 : i32
    %c0_i32_0 = arith.constant 0 : i32
    %c0_i32_1 = arith.constant 0 : i32
    return %c0_i32, %c0_i32_0 : i32, i32
  }
  func.func @transform_9(%arg0: i32) -> (i32, i32) {
    %c0_i32 = arith.constant 0 : i32
    %c0_i32_0 = arith.constant 0 : i32
    return %arg0, %c0_i32 : i32, i32
  }
}

</mosaic_0001>

<llo_original>
// kernel: tpu_custom_call.1
$region0: #{tpu_custom_call.1}
  #allocation0 [shape = 'u32[]', space=smem, size = 0x4, offset = 0x4, fixed_abs, tag = 'smem constant byte address 0x4 - core index']
  #allocation1 [shape = 'u32[144,128]{1,0:T(1,128)}', space=vmem, size = 0x12000, scoped, tag = 'internal scratch']
  %s0 = inlined_call_operand.hbm [shape: f32[8,21], index: 0, kind: input, shape index: {}]
  %s1 = inlined_call_operand.vmem [shape: bf16[21,128], index: 1, kind: input, shape index: {}]
  %s2 = inlined_call_operand.vmem [shape: f32[1,128], index: 2, kind: input, shape index: {}]
  %s3 = inlined_call_operand.vmem [shape: bf16[128,128], index: 3, kind: input, shape index: {}]
  %s4 = inlined_call_operand.vmem [shape: f32[1,128], index: 4, kind: input, shape index: {}]
  %s5 = inlined_call_operand.hbm [shape: bf16[128,128], index: 5, kind: input, shape index: {}]
  %s6 = inlined_call_operand.vmem [shape: f32[1,128], index: 6, kind: input, shape index: {}]
  %s7 = inlined_call_operand.vmem [shape: bf16[128,8], index: 7, kind: input, shape index: {}]
  %s8 = inlined_call_operand.vmem [shape: f32[1,8], index: 8, kind: input, shape index: {}]
  %s9 = inlined_call_operand.hbm [shape: f32[8,8], index: 9, kind: output, shape index: {}]
  %s10 = sld [smem:[#allocation0]]
  $region54: #{tpu_custom_call.1} parent=0
    _
  %s12 = ssub.s32 1, %s10
  %s13 = scalar_select 0, %s12, %s10
  $region1: #{tpu_custom_call.1} parent=0
    #allocation2 [shape = 'u8[4096]{0}', space=vmem, size = 0x1000, scoped, tag = 'input window, operand 0, single buffered']
    #allocation3 [shape = 's32[1]{0}', space=sflag, size = 0x4, scoped, tag = 'scoped memory for tpu_custom_call.1']
    #allocation4 [shape = 's32[1]{0}', space=sflag, size = 0x4, scoped, tag = 'scoped memory for tpu_custom_call.1']
    #allocation5 [shape = 'u8[32768]{0}', space=vmem, size = 0x8000, scoped, tag = 'input window, operand 5, single buffered']
    #allocation6 [shape = 's32[1]{0}', space=sflag, size = 0x4, scoped, tag = 'scoped memory for tpu_custom_call.1']
    #allocation7 [shape = 'u8[4096]{0}', space=vmem, size = 0x1000, scoped, tag = 'output window, operand 0, single buffered']
    %14 = vsyncpa [#allocation3], 0
    %15 = vsyncpa [#allocation6], 0
    %16 = vsyncpa [#allocation4], 0
    // Predicated region
    $region2: #{tpu_custom_call.1} parent=1 // pred_check
      _
    $region3: #{tpu_custom_call.1} parent=1 // pred_check_branch
      %18 = sbr.rel (0) target = $region5
    $region4: #{tpu_custom_call.1} parent=1 // pred_region
      %s20 = ssub.s32 128, 128
      %21 = vsyncadd [#allocation3], %s20
      %s23 = sshll.u32 [#allocation2], 4
      %s24 = int_to_ptr.vmem [resolvable:$true] %s23
      %26 = dma.hbm_to_vmem [thread:$0]  %s0, 128, %s24, [#allocation3]
    $region5: #{tpu_custom_call.1} parent=1 // pred_fallthru
      _
    // Predicated region
    $region6: #{tpu_custom_call.1} parent=1 // pred_check
      _
    $region7: #{tpu_custom_call.1} parent=1 // pred_check_branch
      %28 = sbr.rel (0) target = $region9
    $region8: #{tpu_custom_call.1} parent=1 // pred_region
      _
    $region9: #{tpu_custom_call.1} parent=1 // pred_fallthru
      _
    // Predicated region
    $region10: #{tpu_custom_call.1} parent=1 // pred_check
      _
    $region11: #{tpu_custom_call.1} parent=1 // pred_check_branch
      %30 = sbr.rel (0) target = $region13
    $region12: #{tpu_custom_call.1} parent=1 // pred_region
      _
    $region13: #{tpu_custom_call.1} parent=1 // pred_fallthru
      _
    // Predicated region
    $region14: #{tpu_custom_call.1} parent=1 // pred_check
      _
    $region15: #{tpu_custom_call.1} parent=1 // pred_check_branch
      %32 = sbr.rel (0) target = $region17
    $region16: #{tpu_custom_call.1} parent=1 // pred_region
      _
    $region17: #{tpu_custom_call.1} parent=1 // pred_fallthru
      _
    // Predicated region
    $region18: #{tpu_custom_call.1} parent=1 // pred_check
      _
    $region19: #{tpu_custom_call.1} parent=1 // pred_check_branch
      %34 = sbr.rel (0) target = $region21
    $region20: #{tpu_custom_call.1} parent=1 // pred_region
      _
    $region21: #{tpu_custom_call.1} parent=1 // pred_fallthru
      _
    // Predicated region
    $region22: #{tpu_custom_call.1} parent=1 // pred_check
      _
    $region23: #{tpu_custom_call.1} parent=1 // pred_check_branch
      %36 = sbr.rel (0) target = $region25
    $region24: #{tpu_custom_call.1} parent=1 // pred_region
      %s38 = ssub.s32 1024, 1024
      %39 = vsyncadd [#allocation6], %s38
      %s40 = sshll.u32 [#allocation5], 4
      %s41 = int_to_ptr.vmem [resolvable:$true] %s40
      %46 = dma.hbm_to_vmem [thread:$0]  %s5, 1024, %s41, [#allocation6], 64, 64, 4
    $region25: #{tpu_custom_call.1} parent=1 // pred_fallthru
      _
    // Predicated region
    $region26: #{tpu_custom_call.1} parent=1 // pred_check
      _
    $region27: #{tpu_custom_call.1} parent=1 // pred_check_branch
      %48 = sbr.rel (0) target = $region29
    $region28: #{tpu_custom_call.1} parent=1 // pred_region
      _
    $region29: #{tpu_custom_call.1} parent=1 // pred_fallthru
      _
    // Predicated region
    $region30: #{tpu_custom_call.1} parent=1 // pred_check
      _
    $region31: #{tpu_custom_call.1} parent=1 // pred_check_branch
      %50 = sbr.rel (0) target = $region33
    $region32: #{tpu_custom_call.1} parent=1 // pred_region
      _
    $region33: #{tpu_custom_call.1} parent=1 // pred_fallthru
      _
    // Predicated region
    $region34: #{tpu_custom_call.1} parent=1 // pred_check
      _
    $region35: #{tpu_custom_call.1} parent=1 // pred_check_branch
      %52 = sbr.rel (0) target = $region37
    $region36: #{tpu_custom_call.1} parent=1 // pred_region
      _
    $region37: #{tpu_custom_call.1} parent=1 // pred_fallthru
      _
    // Predicated region
    $region38: #{tpu_custom_call.1} parent=1 // pred_check
      _
    $region39: #{tpu_custom_call.1} parent=1 // pred_check_branch
      %54 = sbr.rel (0) target = $region41
    $region40: #{tpu_custom_call.1} parent=1 // pred_region
      %55 = dma.done [#allocation3], 128
    $region41: #{tpu_custom_call.1} parent=1 // pred_fallthru
      _
    // Predicated region
    $region42: #{tpu_custom_call.1} parent=1 // pred_check
      _
    $region43: #{tpu_custom_call.1} parent=1 // pred_check_branch
      %57 = sbr.rel (0) target = $region45
    $region44: #{tpu_custom_call.1} parent=1 // pred_region
      %58 = dma.done [#allocation6], 1024
    $region45: #{tpu_custom_call.1} parent=1 // pred_fallthru
      _
    %v60 = vld [vmem:[#allocation2] sm:$0xff]
    %v61 = vpack.c.bf16 %v60, %v60
    %v62 = vld [vmem:[%s1] sm:$0xf]
    %v63 = vld [vmem:[%s1 + $0x4] sm:$0xf]
    %v64 = vld [vmem:[%s1 + $0x8] sm:$0x7]
    %v65 = vld [vmem:[%s2] sm:$0x1]
    %v67 = vlaneseq
    %v68 = vshrl.u32 %v67, 7
    %v69 = vsub.s32 0, %v68
    %v70 = vrot.slane %v65, %v69
    %v75 = vunpack.c.l.b16 %v62
    %v76 = vunpack.c.l.b16 %v63
    %v77 = vunpack.c.l.b16 %v64
    %v78 = vpack.c.b16 %v76, %v75
    %v79 = vpack.c.b16 %v77, %v77
    %vm81 = vcmask 171008
    %v83 = vsel %vm81, %v61, 0
    %vm85 = vcmask 1041408
    %vm86 = vcmask 1042432
    %v87 = vsel %vm85, 4294967295, 65535
    %v88 = vsel %vm86, %v87, 0
    %v90 = vand.u32 %v79, %v88
    %92 = vmatprep.subr.bf16.mxu0 0
    %93 = vmatpush1.bf16.msra.mxu0 %v78
    %94 = vmatprep.subr.bf16.mxu0 0
    %95 = vmatpush1.bf16.msra.mxu0 %v90
    %96 = vmatprep.subr.bf16.mxu0 0
    %97 = vmatpush1.bf16.msra.mxu0 0
    %98 = vmatprep.subr.bf16.mxu0 0
    %99 = vmatpush1.bf16.msra.mxu0 0
    %100 = vmatprep.subr.bf16.mxu0 0
    %101 = vmatpush1.bf16.msra.mxu0 0
    %102 = vmatprep.subr.bf16.mxu0 0
    %103 = vmatpush1.bf16.msra.mxu0 0
    %104 = vmatprep.subr.bf16.mxu0 0
    %105 = vmatpush1.bf16.msra.mxu0 0
    %106 = vmatprep.subr.bf16.mxu0 0
    %107 = vmatpush1.bf16.msra.mxu0 0
    %108 = vmatprep.subr.bf16.mxu0 0
    %109 = vmatpush1.bf16.msra.mxu0 0
    %110 = vmatprep.subr.bf16.mxu0 0
    %111 = vmatpush1.bf16.msra.mxu0 0
    %112 = vmatprep.subr.bf16.mxu0 0
    %113 = vmatpush1.bf16.msra.mxu0 0
    %114 = vmatprep.subr.bf16.mxu0 0
    %115 = vmatpush1.bf16.msra.mxu0 0
    %116 = vmatprep.subr.bf16.mxu0 0
    %117 = vmatpush1.bf16.msra.mxu0 0
    %118 = vmatprep.subr.bf16.mxu0 0
    %119 = vmatpush1.bf16.msra.mxu0 0
    %120 = vmatprep.subr.bf16.mxu0 0
    %121 = vmatpush1.bf16.msra.mxu0 0
    %122 = vmatprep.subr.bf16.mxu0 0
    %123 = vmatpush1.bf16.msra.mxu0 0
    %124 = vmatprep.mubr.bf16.mxu0 0
    %125 = vmatmul.mubr.bf16.gmra.mrb[0].mxu0 %v83
    %v126 = vpop.f32.mrb[0].mxu0
    %v127 = vadd.f32 %v70, %v126
    %v128 = vpop.f32.mrb[0].mxu0
    %v129 = vpop.f32.mrb[0].mxu0
    %v130 = vpop.f32.mrb[0].mxu0
    %131 = vdwg.mxu0
    %v132 = vmax.f32 %v127, 0.0
    %v133 = vpack.c.bf16 %v132, %v132
    %v134 = vld [vmem:[%s3] sm:$0xf]
    %v135 = vld [vmem:[%s3 + $0x4] sm:$0xf]
    %v136 = vld [vmem:[%s3 + $0x8] sm:$0xf]
    %v137 = vld [vmem:[%s3 + $0xc] sm:$0xf]
    %v138 = vld [vmem:[%s3 + $0x10] sm:$0xf]
    %v139 = vld [vmem:[%s3 + $0x14] sm:$0xf]
    %v140 = vld [vmem:[%s3 + $0x18] sm:$0xf]
    %v141 = vld [vmem:[%s3 + $0x1c] sm:$0xf]
    %v142 = vld [vmem:[%s3 + $0x20] sm:$0xf]
    %v143 = vld [vmem:[%s3 + $0x24] sm:$0xf]
    %v144 = vld [vmem:[%s3 + $0x28] sm:$0xf]
    %v145 = vld [vmem:[%s3 + $0x2c] sm:$0xf]
    %v146 = vld [vmem:[%s3 + $0x30] sm:$0xf]
    %v147 = vld [vmem:[%s3 + $0x34] sm:$0xf]
    %v148 = vld [vmem:[%s3 + $0x38] sm:$0xf]
    %v149 = vld [vmem:[%s3 + $0x3c] sm:$0xf]
    %v150 = vld [vmem:[%s4] sm:$0x1]
    %v152 = vlaneseq
    %v153 = vshrl.u32 %v152, 7
    %v154 = vsub.s32 0, %v153
    %v155 = vrot.slane %v150, %v154
    %v173 = vunpack.c.l.b16 %v134
    %v174 = vunpack.c.l.b16 %v135
    %v175 = vunpack.c.l.b16 %v136
    %v176 = vunpack.c.l.b16 %v137
    %v177 = vunpack.c.l.b16 %v138
    %v178 = vunpack.c.l.b16 %v139
    %v179 = vunpack.c.l.b16 %v140
    %v180 = vunpack.c.l.b16 %v141
    %v181 = vunpack.c.l.b16 %v142
    %v182 = vunpack.c.l.b16 %v143
    %v183 = vunpack.c.l.b16 %v144
    %v184 = vunpack.c.l.b16 %v145
    %v185 = vunpack.c.l.b16 %v146
    %v186 = vunpack.c.l.b16 %v147
    %v187 = vunpack.c.l.b16 %v148
    %v188 = vunpack.c.l.b16 %v149
    %v189 = vpack.c.b16 %v174, %v173
    %v190 = vpack.c.b16 %v176, %v175
    %v191 = vpack.c.b16 %v178, %v177
    %v192 = vpack.c.b16 %v180, %v179
    %v193 = vpack.c.b16 %v182, %v181
    %v194 = vpack.c.b16 %v184, %v183
    %v195 = vpack.c.b16 %v186, %v185
    %v196 = vpack.c.b16 %v188, %v187
    %205 = vmatprep.subr.bf16.mxu0 0
    %206 = vmatpush1.bf16.msra.mxu0 %v189
    %207 = vmatprep.subr.bf16.mxu0 0
    %208 = vmatpush1.bf16.msra.mxu0 %v190
    %209 = vmatprep.subr.bf16.mxu0 0
    %210 = vmatpush1.bf16.msra.mxu0 %v191
    %211 = vmatprep.subr.bf16.mxu0 0
    %212 = vmatpush1.bf16.msra.mxu0 %v192
    %213 = vmatprep.subr.bf16.mxu0 0
    %214 = vmatpush1.bf16.msra.mxu0 %v193
    %215 = vmatprep.subr.bf16.mxu0 0
    %216 = vmatpush1.bf16.msra.mxu0 %v194
    %217 = vmatprep.subr.bf16.mxu0 0
    %218 = vmatpush1.bf16.msra.mxu0 %v195
    %219 = vmatprep.subr.bf16.mxu0 0
    %220 = vmatpush1.bf16.msra.mxu0 %v196
    %221 = vmatprep.subr.bf16.mxu0 0
    %222 = vmatpush1.bf16.msra.mxu0 0
    %223 = vmatprep.subr.bf16.mxu0 0
    %224 = vmatpush1.bf16.msra.mxu0 0
    %225 = vmatprep.subr.bf16.mxu0 0
    %226 = vmatpush1.bf16.msra.mxu0 0
    %227 = vmatprep.subr.bf16.mxu0 0
    %228 = vmatpush1.bf16.msra.mxu0 0
    %229 = vmatprep.subr.bf16.mxu0 0
    %230 = vmatpush1.bf16.msra.mxu0 0
    %231 = vmatprep.subr.bf16.mxu0 0
    %232 = vmatpush1.bf16.msra.mxu0 0
    %233 = vmatprep.subr.bf16.mxu0 0
    %234 = vmatpush1.bf16.msra.mxu0 0
    %235 = vmatprep.subr.bf16.mxu0 0
    %236 = vmatpush1.bf16.msra.mxu0 0
    %237 = vmatprep.mubr.bf16.mxu0 0
    %238 = vmatmul.mubr.bf16.gmra.mrb[0].mxu0 %v133
    %v239 = vpop.f32.mrb[0].mxu0
    %v240 = vadd.f32 %v155, %v239
    %v241 = vpop.f32.mrb[0].mxu0
    %v242 = vpop.f32.mrb[0].mxu0
    %v243 = vpop.f32.mrb[0].mxu0
    %244 = vdwg.mxu0
    %v245 = vmax.f32 %v240, 0.0
    %v246 = vpack.c.bf16 %v245, %v245
    %v247 = vld [vmem:[#allocation5] sm:$0xf]
    %v248 = vld [vmem:[#allocation5 + $0x4] sm:$0xf]
    %v249 = vld [vmem:[#allocation5 + $0x8] sm:$0xf]
    %v250 = vld [vmem:[#allocation5 + $0xc] sm:$0xf]
    %v251 = vld [vmem:[#allocation5 + $0x10] sm:$0xf]
    %v252 = vld [vmem:[#allocation5 + $0x14] sm:$0xf]
    %v253 = vld [vmem:[#allocation5 + $0x18] sm:$0xf]
    %v254 = vld [vmem:[#allocation5 + $0x1c] sm:$0xf]
    %v255 = vld [vmem:[#allocation5 + $0x20] sm:$0xf]
    %v256 = vld [vmem:[#allocation5 + $0x24] sm:$0xf]
    %v257 = vld [vmem:[#allocation5 + $0x28] sm:$0xf]
    %v258 = vld [vmem:[#allocation5 + $0x2c] sm:$0xf]
    %v259 = vld [vmem:[#allocation5 + $0x30] sm:$0xf]
    %v260 = vld [vmem:[#allocation5 + $0x34] sm:$0xf]
    %v261 = vld [vmem:[#allocation5 + $0x38] sm:$0xf]
    %v262 = vld [vmem:[#allocation5 + $0x3c] sm:$0xf]
    %v263 = vld [vmem:[%s6] sm:$0x1]
    %v265 = vlaneseq
    %v266 = vshrl.u32 %v265, 7
    %v267 = vsub.s32 0, %v266
    %v268 = vrot.slane %v263, %v267
    %v286 = vunpack.c.l.b16 %v247
    %v287 = vunpack.c.l.b16 %v248
    %v288 = vunpack.c.l.b16 %v249
    %v289 = vunpack.c.l.b16 %v250
    %v290 = vunpack.c.l.b16 %v251
    %v291 = vunpack.c.l.b16 %v252
    %v292 = vunpack.c.l.b16 %v253
    %v293 = vunpack.c.l.b16 %v254
    %v294 = vunpack.c.l.b16 %v255
    %v295 = vunpack.c.l.b16 %v256
    %v296 = vunpack.c.l.b16 %v257
    %v297 = vunpack.c.l.b16 %v258
    %v298 = vunpack.c.l.b16 %v259
    %v299 = vunpack.c.l.b16 %v260
    %v300 = vunpack.c.l.b16 %v261
    %v301 = vunpack.c.l.b16 %v262
    %v302 = vpack.c.b16 %v287, %v286
    %v303 = vpack.c.b16 %v289, %v288
    %v304 = vpack.c.b16 %v291, %v290
    %v305 = vpack.c.b16 %v293, %v292
    %v306 = vpack.c.b16 %v295, %v294
    %v307 = vpack.c.b16 %v297, %v296
    %v308 = vpack.c.b16 %v299, %v298
    %v309 = vpack.c.b16 %v301, %v300
    %318 = vmatprep.subr.bf16.mxu0 0
    %319 = vmatpush1.bf16.msra.mxu0 %v302
    %320 = vmatprep.subr.bf16.mxu0 0
    %321 = vmatpush1.bf16.msra.mxu0 %v303
    %322 = vmatprep.subr.bf16.mxu0 0
    %323 = vmatpush1.bf16.msra.mxu0 %v304
    %324 = vmatprep.subr.bf16.mxu0 0
    %325 = vmatpush1.bf16.msra.mxu0 %v305
    %326 = vmatprep.subr.bf16.mxu0 0
    %327 = vmatpush1.bf16.msra.mxu0 %v306
    %328 = vmatprep.subr.bf16.mxu0 0
    %329 = vmatpush1.bf16.msra.mxu0 %v307
    %330 = vmatprep.subr.bf16.mxu0 0
    %331 = vmatpush1.bf16.msra.mxu0 %v308
    %332 = vmatprep.subr.bf16.mxu0 0
    %333 = vmatpush1.bf16.msra.mxu0 %v309
    %334 = vmatprep.subr.bf16.mxu0 0
    %335 = vmatpush1.bf16.msra.mxu0 0
    %336 = vmatprep.subr.bf16.mxu0 0
    %337 = vmatpush1.bf16.msra.mxu0 0
    %338 = vmatprep.subr.bf16.mxu0 0
    %339 = vmatpush1.bf16.msra.mxu0 0
    %340 = vmatprep.subr.bf16.mxu0 0
    %341 = vmatpush1.bf16.msra.mxu0 0
    %342 = vmatprep.subr.bf16.mxu0 0
    %343 = vmatpush1.bf16.msra.mxu0 0
    %344 = vmatprep.subr.bf16.mxu0 0
    %345 = vmatpush1.bf16.msra.mxu0 0
    %346 = vmatprep.subr.bf16.mxu0 0
    %347 = vmatpush1.bf16.msra.mxu0 0
    %348 = vmatprep.subr.bf16.mxu0 0
    %349 = vmatpush1.bf16.msra.mxu0 0
    %350 = vmatprep.mubr.bf16.mxu0 0
    %351 = vmatmul.mubr.bf16.gmra.mrb[0].mxu0 %v246
    %v352 = vpop.f32.mrb[0].mxu0
    %v353 = vadd.f32 %v268, %v352
    %v354 = vpop.f32.mrb[0].mxu0
    %v355 = vpop.f32.mrb[0].mxu0
    %v356 = vpop.f32.mrb[0].mxu0
    %357 = vdwg.mxu0
    %v358 = vmax.f32 %v353, 0.0
    %v359 = vpack.c.bf16 %v358, %v358
    %v360 = vld [vmem:[%s7] sm:$0xf]
    %v361 = vld [vmem:[%s7 + $0x4] sm:$0xf]
    %v362 = vld [vmem:[%s7 + $0x8] sm:$0xf]
    %v363 = vld [vmem:[%s7 + $0xc] sm:$0xf]
    %v364 = vld [vmem:[%s7 + $0x10] sm:$0xf]
    %v365 = vld [vmem:[%s7 + $0x14] sm:$0xf]
    %v366 = vld [vmem:[%s7 + $0x18] sm:$0xf]
    %v367 = vld [vmem:[%s7 + $0x1c] sm:$0xf]
    %v368 = vld [vmem:[%s7 + $0x20] sm:$0xf]
    %v369 = vld [vmem:[%s7 + $0x24] sm:$0xf]
    %v370 = vld [vmem:[%s7 + $0x28] sm:$0xf]
    %v371 = vld [vmem:[%s7 + $0x2c] sm:$0xf]
    %v372 = vld [vmem:[%s7 + $0x30] sm:$0xf]
    %v373 = vld [vmem:[%s7 + $0x34] sm:$0xf]
    %v374 = vld [vmem:[%s7 + $0x38] sm:$0xf]
    %v375 = vld [vmem:[%s7 + $0x3c] sm:$0xf]
    %v376 = vld [vmem:[%s8] sm:$0x1]
    %v378 = vlaneseq
    %v379 = vshrl.u32 %v378, 7
    %v380 = vsub.s32 0, %v379
    %v381 = vrot.slane %v376, %v380
    %v399 = vunpack.c.l.b16 %v360
    %v400 = vunpack.c.l.b16 %v361
    %v401 = vunpack.c.l.b16 %v362
    %v402 = vunpack.c.l.b16 %v363
    %v403 = vunpack.c.l.b16 %v364
    %v404 = vunpack.c.l.b16 %v365
    %v405 = vunpack.c.l.b16 %v366
    %v406 = vunpack.c.l.b16 %v367
    %v407 = vunpack.c.l.b16 %v368
    %v408 = vunpack.c.l.b16 %v369
    %v409 = vunpack.c.l.b16 %v370
    %v410 = vunpack.c.l.b16 %v371
    %v411 = vunpack.c.l.b16 %v372
    %v412 = vunpack.c.l.b16 %v373
    %v413 = vunpack.c.l.b16 %v374
    %v414 = vunpack.c.l.b16 %v375
    %v415 = vpack.c.b16 %v400, %v399
    %v416 = vpack.c.b16 %v402, %v401
    %v417 = vpack.c.b16 %v404, %v403
    %v418 = vpack.c.b16 %v406, %v405
    %v419 = vpack.c.b16 %v408, %v407
    %v420 = vpack.c.b16 %v410, %v409
    %v421 = vpack.c.b16 %v412, %v411
    %v422 = vpack.c.b16 %v414, %v413
    %431 = vmatprep.subr.bf16.mxu0 0
    %432 = vmatpush1.bf16.msra.mxu0 %v415
    %433 = vmatprep.subr.bf16.mxu0 0
    %434 = vmatpush1.bf16.msra.mxu0 %v416
    %435 = vmatprep.subr.bf16.mxu0 0
    %436 = vmatpush1.bf16.msra.mxu0 %v417
    %437 = vmatprep.subr.bf16.mxu0 0
    %438 = vmatpush1.bf16.msra.mxu0 %v418
    %439 = vmatprep.subr.bf16.mxu0 0
    %440 = vmatpush1.bf16.msra.mxu0 %v419
    %441 = vmatprep.subr.bf16.mxu0 0
    %442 = vmatpush1.bf16.msra.mxu0 %v420
    %443 = vmatprep.subr.bf16.mxu0 0
    %444 = vmatpush1.bf16.msra.mxu0 %v421
    %445 = vmatprep.subr.bf16.mxu0 0
    %446 = vmatpush1.bf16.msra.mxu0 %v422
    %447 = vmatprep.subr.bf16.mxu0 0
    %448 = vmatpush1.bf16.msra.mxu0 0
    %449 = vmatprep.subr.bf16.mxu0 0
    %450 = vmatpush1.bf16.msra.mxu0 0
    %451 = vmatprep.subr.bf16.mxu0 0
    %452 = vmatpush1.bf16.msra.mxu0 0
    %453 = vmatprep.subr.bf16.mxu0 0
    %454 = vmatpush1.bf16.msra.mxu0 0
    %455 = vmatprep.subr.bf16.mxu0 0
    %456 = vmatpush1.bf16.msra.mxu0 0
    %457 = vmatprep.subr.bf16.mxu0 0
    %458 = vmatpush1.bf16.msra.mxu0 0
    %459 = vmatprep.subr.bf16.mxu0 0
    %460 = vmatpush1.bf16.msra.mxu0 0
    %461 = vmatprep.subr.bf16.mxu0 0
    %462 = vmatpush1.bf16.msra.mxu0 0
    %463 = vmatprep.mubr.bf16.mxu0 0
    %464 = vmatmul.mubr.bf16.gmra.mrb[0].mxu0 %v359
    %v465 = vpop.f32.mrb[0].mxu0
    %v466 = vadd.f32 %v381, %v465
    %v467 = vpop.f32.mrb[0].mxu0
    %v468 = vpop.f32.mrb[0].mxu0
    %v469 = vpop.f32.mrb[0].mxu0
    %470 = vdwg.mxu0
    %vm471 = vcmask 64512
    %472 = vst.msk [vmem:[#allocation7] sm:$0xff] %vm471, %v466
    // Predicated region
    $region46: #{tpu_custom_call.1} parent=1 // pred_check
      _
    $region47: #{tpu_custom_call.1} parent=1 // pred_check_branch
      %474 = sbr.rel (0) target = $region49
    $region48: #{tpu_custom_call.1} parent=1 // pred_region
      %s476 = ssub.s32 128, 128
      %477 = vsyncadd [#allocation4], %s476
      %s479 = sshll.u32 [#allocation7], 4
      %s480 = int_to_ptr.vmem [resolvable:$true] %s479
      %482 = dma.vmem_to_hbm [thread:$0]  %s480, 128, %s9, [#allocation4]
    $region49: #{tpu_custom_call.1} parent=1 // pred_fallthru
      _
    // Predicated region
    $region50: #{tpu_custom_call.1} parent=1 // pred_check
      _
    $region51: #{tpu_custom_call.1} parent=1 // pred_check_branch
      %484 = sbr.rel (0) target = $region53
    $region52: #{tpu_custom_call.1} parent=1 // pred_region
      %485 = dma.done [#allocation4], 128
    $region53: #{tpu_custom_call.1} parent=1 // pred_fallthru
      _
    %486 = vsyncpa [#allocation3], 1
    %487 = vsyncpa [#allocation6], 1
    %488 = vsyncpa [#allocation4], 1

</llo_original>
